<compile_context>
chip_gen: v7x
topology: tpu7x:2x2x1
jax: 0.10.0
libtpu: 0.0.40
codegen_flags: <defaults>
</compile_context>

<pallas_src>
import jax
import jax.numpy as jnp
from jax.experimental import pallas as pl
from jax.experimental.pallas import tpu as pltpu

NEG_SLOPE = 0.6904382

# Conv hyper-parameters fixed by the PyTorch module.
CIN, COUT1, COUT2 = 4, 2, 2
KH, KW = 2, 2
SH, SW = 1, 2
PH, PW = 0, 2


def _fused_conv_kernel(x_ref, w_ref, b_ref, out_ref):
    # x_ref  : [CIN, SW, H, OW]  f32 VMEM  (W already deinterleaved by stride)
    # w_ref  : [COUT2, K]        f32 SMEM  (conv2 folded into conv1)
    # b_ref  : [COUT2]           f32 SMEM  (folded bias)
    # out_ref: [COUT2, OH, OW]   f32 VMEM  (one NCHW batch element)
    cout, OH, _ = out_ref.shape

    accs = [jnp.zeros((OH, out_ref.shape[2]), jnp.float32) + b_ref[c]
            for c in range(cout)]

    k = 0
    for cin in range(CIN):
        for kh in range(KH):
            for kw in range(KW):
                # Full [OH, OW] tile per tap: contiguous lanes, contiguous
                # sublane window offset by kh (the two KH taps).
                tap = x_ref[cin, kw, pl.ds(kh, OH), :]
                for c in range(cout):
                    accs[c] = accs[c] + w_ref[c, k] * tap
                k += 1

    for c in range(cout):
        a = accs[c]
        out_ref[c] = jnp.where(a > 0.0, a, a * NEG_SLOPE)


@jax.jit
def model_forward(x, w1, b1, w2, b2):
    """x: [N, 4, H, W] float32 (NCHW).  Returns [N, 2, OH, OW] float32."""
    N, Cin, H, W = x.shape
    assert Cin == CIN

    OH = (H + 2 * PH - KH) // SH + 1
    OW = (W + 2 * PW - KW) // SW + 1
    K = Cin * KH * KW
    Hp = H + 2 * PH
    Wp = W + 2 * PW

    # ---- fold conv2 (1x1) into conv1 (exact f32 elementwise algebra) -------
    w1m = w1.reshape(COUT1, K).astype(jnp.float32)                    # [C1, K]
    w2m = w2.reshape(COUT2, COUT1).astype(jnp.float32)                # [C2, C1]
    w_fold = (w2m[:, :, None] * w1m[None, :, :]).sum(axis=1)          # [C2, K]
    b_fold = (w2m * b1.astype(jnp.float32)[None, :]).sum(axis=1) \
        + b2.astype(jnp.float32)                                      # [C2]

    # ---- light layout prep (no im2col): pad W, deinterleave stride-2 cols --
    # Tap (kw, ow) needs padded column SW*ow + kw; with KW == SW == 2 the
    # padded width reshapes exactly into (OW, SW) and tap kw is plane [..., kw].
    assert KW <= SW and SW * OW <= Wp
    xp = jnp.pad(x.astype(jnp.float32),
                 ((0, 0), (0, 0), (PH, PH), (PW, PW)))[..., :SW * OW]
    # [N, Cin, Hp, OW, SW] -> [N, Cin, SW, Hp, OW]   (tiny one-shot transpose)
    x_t = xp.reshape(N, Cin, Hp, OW, SW).transpose(0, 1, 4, 2, 3)

    cost = pl.CostEstimate(
        flops=2 * N * OH * OW * K * COUT2,
        transcendentals=0,
        bytes_accessed=4 * (N * Cin * SW * Hp * OW + N * COUT2 * OH * OW
                            + COUT2 * K + COUT2),
    )

    # TODO(synk): for very large images, additionally tile the grid over OH
    # rows (two row-offset BlockSpecs) so the per-step block stays in VMEM.
    out = pl.pallas_call(
        _fused_conv_kernel,
        out_shape=jax.ShapeDtypeStruct((N, COUT2, OH, OW), jnp.float32),
        grid_spec=pltpu.PrefetchScalarGridSpec(
            num_scalar_prefetch=0,
            grid=(N,),
            in_specs=[
                pl.BlockSpec((None, Cin, SW, Hp, OW),
                             lambda n: (n, 0, 0, 0, 0)),               # x_t
                pl.BlockSpec(memory_space=pltpu.MemorySpace.SMEM),     # w_fold
                pl.BlockSpec(memory_space=pltpu.MemorySpace.SMEM),     # b_fold
            ],
            out_specs=pl.BlockSpec((None, COUT2, OH, OW),
                                   lambda n: (n, 0, 0, 0)),
        ),
        compiler_params=pltpu.CompilerParams(
            dimension_semantics=("parallel",)),
        cost_estimate=cost,
    )(x_t, w_fold, b_fold)
    return out


def _reference(x, w1, b1, w2, b2):
    # pure-JAX reference using lax conv (sanity check), full f32 precision
    dn = ("NCHW", "OIHW", "NCHW")
    v1 = jax.lax.conv_general_dilated(
        x, w1, window_strides=(SH, SW), padding=((PH, PH), (PW, PW)),
        dimension_numbers=dn, precision=jax.lax.Precision.HIGHEST)
    v1 = v1 + b1.reshape(1, -1, 1, 1)
    v2 = jax.lax.conv_general_dilated(
        v1, w2, window_strides=(1, 1), padding=((0, 0), (0, 0)),
        dimension_numbers=dn, precision=jax.lax.Precision.HIGHEST)
    v2 = v2 + b2.reshape(1, -1, 1, 1)
    return jnp.where(v2 > 0, v2, v2 * NEG_SLOPE)


if __name__ == "__main__":
    key = jax.random.PRNGKey(0)
    kx, k1, k2, k3, k4 = jax.random.split(key, 5)

    # small shapes consistent with the module: NCHW, Cin=4
    x = jax.random.normal(kx, (2, 4, 16, 16), dtype=jnp.float32)

    # deterministic parameter init (conv1: [2,4,2,2], conv2: [2,2,1,1])
    w1 = 0.1 * jax.random.normal(k1, (2, 4, 2, 2), dtype=jnp.float32)
    b1 = 0.1 * jax.random.normal(k2, (2,), dtype=jnp.float32)
    w2 = 0.1 * jax.random.normal(k3, (2, 2, 1, 1), dtype=jnp.float32)
    b2 = 0.1 * jax.random.normal(k4, (2,), dtype=jnp.float32)

    out = jax.block_until_ready(model_forward(x, w1, b1, w2, b2))
    ref = jax.block_until_ready(_reference(x, w1, b1, w2, b2))

    assert out.shape == (2, 2, 15, 10), out.shape
    assert jnp.allclose(out, ref, atol=2e-5, rtol=2e-5), float(
        jnp.max(jnp.abs(out - ref)))

    print("KERNEL_OK")
</pallas_src>

<mosaic_0001>
module attributes {stable_mosaic.version = 11 : i64} {
  func.func @_fused_conv_kernel(%arg0: i32, %arg1: memref<1x4x2x16x10xf32, #tpu.memory_space<vmem>>, %arg2: memref<2x16xf32, #tpu.memory_space<smem>>, %arg3: memref<2xf32, #tpu.memory_space<smem>>, %arg4: memref<1x2x15x10xf32, #tpu.memory_space<vmem>>) attributes {dimension_semantics = [#tpu.dimension_semantics<parallel>], iteration_bounds = array<i64: 2>, scalar_prefetch = 0 : i64, scratch_operands = 0 : i64, tpu.core_type = #tpu.core_type<tc>, window_params = [{transform_indices = @transform_0, window_bounds = array<i64: 1, 4, 2, 16, 10>}, {transform_indices = @transform_1, window_bounds = array<i64: 2, 16>}, {transform_indices = @transform_2, window_bounds = array<i64: 2>}, {transform_indices = @transform_3, window_bounds = array<i64: 1, 2, 15, 10>}]} {
    %cst = arith.constant 0.000000e+00 : f32
    %0 = vector.broadcast %cst : f32 to vector<15x10xf32>
    %c0 = arith.constant 0 : index
    %1 = memref.load %arg3[%c0] : memref<2xf32, #tpu.memory_space<smem>>
    %2 = vector.broadcast %1 : f32 to vector<15x10xf32>
    %3 = arith.addf %0, %2 : vector<15x10xf32>
    %cst_0 = arith.constant 0.000000e+00 : f32
    %4 = vector.broadcast %cst_0 : f32 to vector<15x10xf32>
    %c1 = arith.constant 1 : index
    %5 = memref.load %arg3[%c1] : memref<2xf32, #tpu.memory_space<smem>>
    %6 = vector.broadcast %5 : f32 to vector<15x10xf32>
    %7 = arith.addf %4, %6 : vector<15x10xf32>
    %c0_1 = arith.constant 0 : index
    %c0_2 = arith.constant 0 : index
    %c0_3 = arith.constant 0 : index
    %c0_4 = arith.constant 0 : index
    %c0_5 = arith.constant 0 : index
    %8 = vector.load %arg1[%c0_1, %c0_2, %c0_3, %c0_4, %c0_5] : memref<1x4x2x16x10xf32, #tpu.memory_space<vmem>>, vector<1x1x1x15x10xf32>
    %9 = vector.shape_cast %8 : vector<1x1x1x15x10xf32> to vector<15x10xf32>
    %c0_6 = arith.constant 0 : index
    %c0_7 = arith.constant 0 : index
    %10 = memref.load %arg2[%c0_6, %c0_7] : memref<2x16xf32, #tpu.memory_space<smem>>
    %11 = vector.broadcast %10 : f32 to vector<15x10xf32>
    %12 = arith.mulf %11, %9 : vector<15x10xf32>
    %13 = arith.addf %3, %12 : vector<15x10xf32>
    %c1_8 = arith.constant 1 : index
    %c0_9 = arith.constant 0 : index
    %14 = memref.load %arg2[%c1_8, %c0_9] : memref<2x16xf32, #tpu.memory_space<smem>>
    %15 = vector.broadcast %14 : f32 to vector<15x10xf32>
    %16 = arith.mulf %15, %9 : vector<15x10xf32>
    %17 = arith.addf %7, %16 : vector<15x10xf32>
    %c0_10 = arith.constant 0 : index
    %c0_11 = arith.constant 0 : index
    %c1_12 = arith.constant 1 : index
    %c0_13 = arith.constant 0 : index
    %c0_14 = arith.constant 0 : index
    %18 = vector.load %arg1[%c0_10, %c0_11, %c1_12, %c0_13, %c0_14] : memref<1x4x2x16x10xf32, #tpu.memory_space<vmem>>, vector<1x1x1x15x10xf32>
    %19 = vector.shape_cast %18 : vector<1x1x1x15x10xf32> to vector<15x10xf32>
    %c0_15 = arith.constant 0 : index
    %c1_16 = arith.constant 1 : index
    %20 = memref.load %arg2[%c0_15, %c1_16] : memref<2x16xf32, #tpu.memory_space<smem>>
    %21 = vector.broadcast %20 : f32 to vector<15x10xf32>
    %22 = arith.mulf %21, %19 : vector<15x10xf32>
    %23 = arith.addf %13, %22 : vector<15x10xf32>
    %c1_17 = arith.constant 1 : index
    %c1_18 = arith.constant 1 : index
    %24 = memref.load %arg2[%c1_17, %c1_18] : memref<2x16xf32, #tpu.memory_space<smem>>
    %25 = vector.broadcast %24 : f32 to vector<15x10xf32>
    %26 = arith.mulf %25, %19 : vector<15x10xf32>
    %27 = arith.addf %17, %26 : vector<15x10xf32>
    %c0_19 = arith.constant 0 : index
    %c0_20 = arith.constant 0 : index
    %c0_21 = arith.constant 0 : index
    %c1_22 = arith.constant 1 : index
    %c0_23 = arith.constant 0 : index
    %28 = vector.load %arg1[%c0_19, %c0_20, %c0_21, %c1_22, %c0_23] : memref<1x4x2x16x10xf32, #tpu.memory_space<vmem>>, vector<1x1x1x15x10xf32>
    %29 = vector.shape_cast %28 : vector<1x1x1x15x10xf32> to vector<15x10xf32>
    %c0_24 = arith.constant 0 : index
    %c2 = arith.constant 2 : index
    %30 = memref.load %arg2[%c0_24, %c2] : memref<2x16xf32, #tpu.memory_space<smem>>
    %31 = vector.broadcast %30 : f32 to vector<15x10xf32>
    %32 = arith.mulf %31, %29 : vector<15x10xf32>
    %33 = arith.addf %23, %32 : vector<15x10xf32>
    %c1_25 = arith.constant 1 : index
    %c2_26 = arith.constant 2 : index
    %34 = memref.load %arg2[%c1_25, %c2_26] : memref<2x16xf32, #tpu.memory_space<smem>>
    %35 = vector.broadcast %34 : f32 to vector<15x10xf32>
    %36 = arith.mulf %35, %29 : vector<15x10xf32>
    %37 = arith.addf %27, %36 : vector<15x10xf32>
    %c0_27 = arith.constant 0 : index
    %c0_28 = arith.constant 0 : index
    %c1_29 = arith.constant 1 : index
    %c1_30 = arith.constant 1 : index
    %c0_31 = arith.constant 0 : index
    %38 = vector.load %arg1[%c0_27, %c0_28, %c1_29, %c1_30, %c0_31] : memref<1x4x2x16x10xf32, #tpu.memory_space<vmem>>, vector<1x1x1x15x10xf32>
    %39 = vector.shape_cast %38 : vector<1x1x1x15x10xf32> to vector<15x10xf32>
    %c0_32 = arith.constant 0 : index
    %c3 = arith.constant 3 : index
    %40 = memref.load %arg2[%c0_32, %c3] : memref<2x16xf32, #tpu.memory_space<smem>>
    %41 = vector.broadcast %40 : f32 to vector<15x10xf32>
    %42 = arith.mulf %41, %39 : vector<15x10xf32>
    %43 = arith.addf %33, %42 : vector<15x10xf32>
    %c1_33 = arith.constant 1 : index
    %c3_34 = arith.constant 3 : index
    %44 = memref.load %arg2[%c1_33, %c3_34] : memref<2x16xf32, #tpu.memory_space<smem>>
    %45 = vector.broadcast %44 : f32 to vector<15x10xf32>
    %46 = arith.mulf %45, %39 : vector<15x10xf32>
    %47 = arith.addf %37, %46 : vector<15x10xf32>
    %c0_35 = arith.constant 0 : index
    %c1_36 = arith.constant 1 : index
    %c0_37 = arith.constant 0 : index
    %c0_38 = arith.constant 0 : index
    %c0_39 = arith.constant 0 : index
    %48 = vector.load %arg1[%c0_35, %c1_36, %c0_37, %c0_38, %c0_39] : memref<1x4x2x16x10xf32, #tpu.memory_space<vmem>>, vector<1x1x1x15x10xf32>
    %49 = vector.shape_cast %48 : vector<1x1x1x15x10xf32> to vector<15x10xf32>
    %c0_40 = arith.constant 0 : index
    %c4 = arith.constant 4 : index
    %50 = memref.load %arg2[%c0_40, %c4] : memref<2x16xf32, #tpu.memory_space<smem>>
    %51 = vector.broadcast %50 : f32 to vector<15x10xf32>
    %52 = arith.mulf %51, %49 : vector<15x10xf32>
    %53 = arith.addf %43, %52 : vector<15x10xf32>
    %c1_41 = arith.constant 1 : index
    %c4_42 = arith.constant 4 : index
    %54 = memref.load %arg2[%c1_41, %c4_42] : memref<2x16xf32, #tpu.memory_space<smem>>
    %55 = vector.broadcast %54 : f32 to vector<15x10xf32>
    %56 = arith.mulf %55, %49 : vector<15x10xf32>
    %57 = arith.addf %47, %56 : vector<15x10xf32>
    %c0_43 = arith.constant 0 : index
    %c1_44 = arith.constant 1 : index
    %c1_45 = arith.constant 1 : index
    %c0_46 = arith.constant 0 : index
    %c0_47 = arith.constant 0 : index
    %58 = vector.load %arg1[%c0_43, %c1_44, %c1_45, %c0_46, %c0_47] : memref<1x4x2x16x10xf32, #tpu.memory_space<vmem>>, vector<1x1x1x15x10xf32>
    %59 = vector.shape_cast %58 : vector<1x1x1x15x10xf32> to vector<15x10xf32>
    %c0_48 = arith.constant 0 : index
    %c5 = arith.constant 5 : index
    %60 = memref.load %arg2[%c0_48, %c5] : memref<2x16xf32, #tpu.memory_space<smem>>
    %61 = vector.broadcast %60 : f32 to vector<15x10xf32>
    %62 = arith.mulf %61, %59 : vector<15x10xf32>
    %63 = arith.addf %53, %62 : vector<15x10xf32>
    %c1_49 = arith.constant 1 : index
    %c5_50 = arith.constant 5 : index
    %64 = memref.load %arg2[%c1_49, %c5_50] : memref<2x16xf32, #tpu.memory_space<smem>>
    %65 = vector.broadcast %64 : f32 to vector<15x10xf32>
    %66 = arith.mulf %65, %59 : vector<15x10xf32>
    %67 = arith.addf %57, %66 : vector<15x10xf32>
    %c0_51 = arith.constant 0 : index
    %c1_52 = arith.constant 1 : index
    %c0_53 = arith.constant 0 : index
    %c1_54 = arith.constant 1 : index
    %c0_55 = arith.constant 0 : index
    %68 = vector.load %arg1[%c0_51, %c1_52, %c0_53, %c1_54, %c0_55] : memref<1x4x2x16x10xf32, #tpu.memory_space<vmem>>, vector<1x1x1x15x10xf32>
    %69 = vector.shape_cast %68 : vector<1x1x1x15x10xf32> to vector<15x10xf32>
    %c0_56 = arith.constant 0 : index
    %c6 = arith.constant 6 : index
    %70 = memref.load %arg2[%c0_56, %c6] : memref<2x16xf32, #tpu.memory_space<smem>>
    %71 = vector.broadcast %70 : f32 to vector<15x10xf32>
    %72 = arith.mulf %71, %69 : vector<15x10xf32>
    %73 = arith.addf %63, %72 : vector<15x10xf32>
    %c1_57 = arith.constant 1 : index
    %c6_58 = arith.constant 6 : index
    %74 = memref.load %arg2[%c1_57, %c6_58] : memref<2x16xf32, #tpu.memory_space<smem>>
    %75 = vector.broadcast %74 : f32 to vector<15x10xf32>
    %76 = arith.mulf %75, %69 : vector<15x10xf32>
    %77 = arith.addf %67, %76 : vector<15x10xf32>
    %c0_59 = arith.constant 0 : index
    %c1_60 = arith.constant 1 : index
    %c1_61 = arith.constant 1 : index
    %c1_62 = arith.constant 1 : index
    %c0_63 = arith.constant 0 : index
    %78 = vector.load %arg1[%c0_59, %c1_60, %c1_61, %c1_62, %c0_63] : memref<1x4x2x16x10xf32, #tpu.memory_space<vmem>>, vector<1x1x1x15x10xf32>
    %79 = vector.shape_cast %78 : vector<1x1x1x15x10xf32> to vector<15x10xf32>
    %c0_64 = arith.constant 0 : index
    %c7 = arith.constant 7 : index
    %80 = memref.load %arg2[%c0_64, %c7] : memref<2x16xf32, #tpu.memory_space<smem>>
    %81 = vector.broadcast %80 : f32 to vector<15x10xf32>
    %82 = arith.mulf %81, %79 : vector<15x10xf32>
    %83 = arith.addf %73, %82 : vector<15x10xf32>
    %c1_65 = arith.constant 1 : index
    %c7_66 = arith.constant 7 : index
    %84 = memref.load %arg2[%c1_65, %c7_66] : memref<2x16xf32, #tpu.memory_space<smem>>
    %85 = vector.broadcast %84 : f32 to vector<15x10xf32>
    %86 = arith.mulf %85, %79 : vector<15x10xf32>
    %87 = arith.addf %77, %86 : vector<15x10xf32>
    %c0_67 = arith.constant 0 : index
    %c2_68 = arith.constant 2 : index
    %c0_69 = arith.constant 0 : index
    %c0_70 = arith.constant 0 : index
    %c0_71 = arith.constant 0 : index
    %88 = vector.load %arg1[%c0_67, %c2_68, %c0_69, %c0_70, %c0_71] : memref<1x4x2x16x10xf32, #tpu.memory_space<vmem>>, vector<1x1x1x15x10xf32>
    %89 = vector.shape_cast %88 : vector<1x1x1x15x10xf32> to vector<15x10xf32>
    %c0_72 = arith.constant 0 : index
    %c8 = arith.constant 8 : index
    %90 = memref.load %arg2[%c0_72, %c8] : memref<2x16xf32, #tpu.memory_space<smem>>
    %91 = vector.broadcast %90 : f32 to vector<15x10xf32>
    %92 = arith.mulf %91, %89 : vector<15x10xf32>
    %93 = arith.addf %83, %92 : vector<15x10xf32>
    %c1_73 = arith.constant 1 : index
    %c8_74 = arith.constant 8 : index
    %94 = memref.load %arg2[%c1_73, %c8_74] : memref<2x16xf32, #tpu.memory_space<smem>>
    %95 = vector.broadcast %94 : f32 to vector<15x10xf32>
    %96 = arith.mulf %95, %89 : vector<15x10xf32>
    %97 = arith.addf %87, %96 : vector<15x10xf32>
    %c0_75 = arith.constant 0 : index
    %c2_76 = arith.constant 2 : index
    %c1_77 = arith.constant 1 : index
    %c0_78 = arith.constant 0 : index
    %c0_79 = arith.constant 0 : index
    %98 = vector.load %arg1[%c0_75, %c2_76, %c1_77, %c0_78, %c0_79] : memref<1x4x2x16x10xf32, #tpu.memory_space<vmem>>, vector<1x1x1x15x10xf32>
    %99 = vector.shape_cast %98 : vector<1x1x1x15x10xf32> to vector<15x10xf32>
    %c0_80 = arith.constant 0 : index
    %c9 = arith.constant 9 : index
    %100 = memref.load %arg2[%c0_80, %c9] : memref<2x16xf32, #tpu.memory_space<smem>>
    %101 = vector.broadcast %100 : f32 to vector<15x10xf32>
    %102 = arith.mulf %101, %99 : vector<15x10xf32>
    %103 = arith.addf %93, %102 : vector<15x10xf32>
    %c1_81 = arith.constant 1 : index
    %c9_82 = arith.constant 9 : index
    %104 = memref.load %arg2[%c1_81, %c9_82] : memref<2x16xf32, #tpu.memory_space<smem>>
    %105 = vector.broadcast %104 : f32 to vector<15x10xf32>
    %106 = arith.mulf %105, %99 : vector<15x10xf32>
    %107 = arith.addf %97, %106 : vector<15x10xf32>
    %c0_83 = arith.constant 0 : index
    %c2_84 = arith.constant 2 : index
    %c0_85 = arith.constant 0 : index
    %c1_86 = arith.constant 1 : index
    %c0_87 = arith.constant 0 : index
    %108 = vector.load %arg1[%c0_83, %c2_84, %c0_85, %c1_86, %c0_87] : memref<1x4x2x16x10xf32, #tpu.memory_space<vmem>>, vector<1x1x1x15x10xf32>
    %109 = vector.shape_cast %108 : vector<1x1x1x15x10xf32> to vector<15x10xf32>
    %c0_88 = arith.constant 0 : index
    %c10 = arith.constant 10 : index
    %110 = memref.load %arg2[%c0_88, %c10] : memref<2x16xf32, #tpu.memory_space<smem>>
    %111 = vector.broadcast %110 : f32 to vector<15x10xf32>
    %112 = arith.mulf %111, %109 : vector<15x10xf32>
    %113 = arith.addf %103, %112 : vector<15x10xf32>
    %c1_89 = arith.constant 1 : index
    %c10_90 = arith.constant 10 : index
    %114 = memref.load %arg2[%c1_89, %c10_90] : memref<2x16xf32, #tpu.memory_space<smem>>
    %115 = vector.broadcast %114 : f32 to vector<15x10xf32>
    %116 = arith.mulf %115, %109 : vector<15x10xf32>
    %117 = arith.addf %107, %116 : vector<15x10xf32>
    %c0_91 = arith.constant 0 : index
    %c2_92 = arith.constant 2 : index
    %c1_93 = arith.constant 1 : index
    %c1_94 = arith.constant 1 : index
    %c0_95 = arith.constant 0 : index
    %118 = vector.load %arg1[%c0_91, %c2_92, %c1_93, %c1_94, %c0_95] : memref<1x4x2x16x10xf32, #tpu.memory_space<vmem>>, vector<1x1x1x15x10xf32>
    %119 = vector.shape_cast %118 : vector<1x1x1x15x10xf32> to vector<15x10xf32>
    %c0_96 = arith.constant 0 : index
    %c11 = arith.constant 11 : index
    %120 = memref.load %arg2[%c0_96, %c11] : memref<2x16xf32, #tpu.memory_space<smem>>
    %121 = vector.broadcast %120 : f32 to vector<15x10xf32>
    %122 = arith.mulf %121, %119 : vector<15x10xf32>
    %123 = arith.addf %113, %122 : vector<15x10xf32>
    %c1_97 = arith.constant 1 : index
    %c11_98 = arith.constant 11 : index
    %124 = memref.load %arg2[%c1_97, %c11_98] : memref<2x16xf32, #tpu.memory_space<smem>>
    %125 = vector.broadcast %124 : f32 to vector<15x10xf32>
    %126 = arith.mulf %125, %119 : vector<15x10xf32>
    %127 = arith.addf %117, %126 : vector<15x10xf32>
    %c0_99 = arith.constant 0 : index
    %c3_100 = arith.constant 3 : index
    %c0_101 = arith.constant 0 : index
    %c0_102 = arith.constant 0 : index
    %c0_103 = arith.constant 0 : index
    %128 = vector.load %arg1[%c0_99, %c3_100, %c0_101, %c0_102, %c0_103] : memref<1x4x2x16x10xf32, #tpu.memory_space<vmem>>, vector<1x1x1x15x10xf32>
    %129 = vector.shape_cast %128 : vector<1x1x1x15x10xf32> to vector<15x10xf32>
    %c0_104 = arith.constant 0 : index
    %c12 = arith.constant 12 : index
    %130 = memref.load %arg2[%c0_104, %c12] : memref<2x16xf32, #tpu.memory_space<smem>>
    %131 = vector.broadcast %130 : f32 to vector<15x10xf32>
    %132 = arith.mulf %131, %129 : vector<15x10xf32>
    %133 = arith.addf %123, %132 : vector<15x10xf32>
    %c1_105 = arith.constant 1 : index
    %c12_106 = arith.constant 12 : index
    %134 = memref.load %arg2[%c1_105, %c12_106] : memref<2x16xf32, #tpu.memory_space<smem>>
    %135 = vector.broadcast %134 : f32 to vector<15x10xf32>
    %136 = arith.mulf %135, %129 : vector<15x10xf32>
    %137 = arith.addf %127, %136 : vector<15x10xf32>
    %c0_107 = arith.constant 0 : index
    %c3_108 = arith.constant 3 : index
    %c1_109 = arith.constant 1 : index
    %c0_110 = arith.constant 0 : index
    %c0_111 = arith.constant 0 : index
    %138 = vector.load %arg1[%c0_107, %c3_108, %c1_109, %c0_110, %c0_111] : memref<1x4x2x16x10xf32, #tpu.memory_space<vmem>>, vector<1x1x1x15x10xf32>
    %139 = vector.shape_cast %138 : vector<1x1x1x15x10xf32> to vector<15x10xf32>
    %c0_112 = arith.constant 0 : index
    %c13 = arith.constant 13 : index
    %140 = memref.load %arg2[%c0_112, %c13] : memref<2x16xf32, #tpu.memory_space<smem>>
    %141 = vector.broadcast %140 : f32 to vector<15x10xf32>
    %142 = arith.mulf %141, %139 : vector<15x10xf32>
    %143 = arith.addf %133, %142 : vector<15x10xf32>
    %c1_113 = arith.constant 1 : index
    %c13_114 = arith.constant 13 : index
    %144 = memref.load %arg2[%c1_113, %c13_114] : memref<2x16xf32, #tpu.memory_space<smem>>
    %145 = vector.broadcast %144 : f32 to vector<15x10xf32>
    %146 = arith.mulf %145, %139 : vector<15x10xf32>
    %147 = arith.addf %137, %146 : vector<15x10xf32>
    %c0_115 = arith.constant 0 : index
    %c3_116 = arith.constant 3 : index
    %c0_117 = arith.constant 0 : index
    %c1_118 = arith.constant 1 : index
    %c0_119 = arith.constant 0 : index
    %148 = vector.load %arg1[%c0_115, %c3_116, %c0_117, %c1_118, %c0_119] : memref<1x4x2x16x10xf32, #tpu.memory_space<vmem>>, vector<1x1x1x15x10xf32>
    %149 = vector.shape_cast %148 : vector<1x1x1x15x10xf32> to vector<15x10xf32>
    %c0_120 = arith.constant 0 : index
    %c14 = arith.constant 14 : index
    %150 = memref.load %arg2[%c0_120, %c14] : memref<2x16xf32, #tpu.memory_space<smem>>
    %151 = vector.broadcast %150 : f32 to vector<15x10xf32>
    %152 = arith.mulf %151, %149 : vector<15x10xf32>
    %153 = arith.addf %143, %152 : vector<15x10xf32>
    %c1_121 = arith.constant 1 : index
    %c14_122 = arith.constant 14 : index
    %154 = memref.load %arg2[%c1_121, %c14_122] : memref<2x16xf32, #tpu.memory_space<smem>>
    %155 = vector.broadcast %154 : f32 to vector<15x10xf32>
    %156 = arith.mulf %155, %149 : vector<15x10xf32>
    %157 = arith.addf %147, %156 : vector<15x10xf32>
    %c0_123 = arith.constant 0 : index
    %c3_124 = arith.constant 3 : index
    %c1_125 = arith.constant 1 : index
    %c1_126 = arith.constant 1 : index
    %c0_127 = arith.constant 0 : index
    %158 = vector.load %arg1[%c0_123, %c3_124, %c1_125, %c1_126, %c0_127] : memref<1x4x2x16x10xf32, #tpu.memory_space<vmem>>, vector<1x1x1x15x10xf32>
    %159 = vector.shape_cast %158 : vector<1x1x1x15x10xf32> to vector<15x10xf32>
    %c0_128 = arith.constant 0 : index
    %c15 = arith.constant 15 : index
    %160 = memref.load %arg2[%c0_128, %c15] : memref<2x16xf32, #tpu.memory_space<smem>>
    %161 = vector.broadcast %160 : f32 to vector<15x10xf32>
    %162 = arith.mulf %161, %159 : vector<15x10xf32>
    %163 = arith.addf %153, %162 : vector<15x10xf32>
    %c1_129 = arith.constant 1 : index
    %c15_130 = arith.constant 15 : index
    %164 = memref.load %arg2[%c1_129, %c15_130] : memref<2x16xf32, #tpu.memory_space<smem>>
    %165 = vector.broadcast %164 : f32 to vector<15x10xf32>
    %166 = arith.mulf %165, %159 : vector<15x10xf32>
    %167 = arith.addf %157, %166 : vector<15x10xf32>
    %cst_131 = arith.constant 0.000000e+00 : f32
    %168 = vector.broadcast %cst_131 : f32 to vector<15x10xf32>
    %169 = arith.cmpf ogt, %163, %168 : vector<15x10xf32>
    %cst_132 = arith.constant 0.69043821 : f32
    %170 = vector.broadcast %cst_132 : f32 to vector<15x10xf32>
    %171 = arith.mulf %163, %170 : vector<15x10xf32>
    %172 = arith.select %169, %163, %171 : vector<15x10xi1>, vector<15x10xf32>
    %c0_133 = arith.constant 0 : index
    %c0_134 = arith.constant 0 : index
    %c0_135 = arith.constant 0 : index
    %c0_136 = arith.constant 0 : index
    %173 = vector.load %arg4[%c0_133, %c0_134, %c0_135, %c0_136] : memref<1x2x15x10xf32, #tpu.memory_space<vmem>>, vector<1x1x15x10xf32>
    %174 = vector.shape_cast %173 : vector<1x1x15x10xf32> to vector<15x10xf32>
    %175 = vector.shape_cast %172 : vector<15x10xf32> to vector<1x1x15x10xf32>
    tpu.vector_store %arg4[%c0_133, %c0_134, %c0_135, %c0_136], %175 {strides = array<i32>} : memref<1x2x15x10xf32, #tpu.memory_space<vmem>>, vector<1x1x15x10xf32>,
    %cst_137 = arith.constant 0.000000e+00 : f32
    %176 = vector.broadcast %cst_137 : f32 to vector<15x10xf32>
    %177 = arith.cmpf ogt, %167, %176 : vector<15x10xf32>
    %cst_138 = arith.constant 0.69043821 : f32
    %178 = vector.broadcast %cst_138 : f32 to vector<15x10xf32>
    %179 = arith.mulf %167, %178 : vector<15x10xf32>
    %180 = arith.select %177, %167, %179 : vector<15x10xi1>, vector<15x10xf32>
    %c0_139 = arith.constant 0 : index
    %c1_140 = arith.constant 1 : index
    %c0_141 = arith.constant 0 : index
    %c0_142 = arith.constant 0 : index
    %181 = vector.load %arg4[%c0_139, %c1_140, %c0_141, %c0_142] : memref<1x2x15x10xf32, #tpu.memory_space<vmem>>, vector<1x1x15x10xf32>
    %182 = vector.shape_cast %181 : vector<1x1x15x10xf32> to vector<15x10xf32>
    %183 = vector.shape_cast %180 : vector<15x10xf32> to vector<1x1x15x10xf32>
    tpu.vector_store %arg4[%c0_139, %c1_140, %c0_141, %c0_142], %183 {strides = array<i32>} : memref<1x2x15x10xf32, #tpu.memory_space<vmem>>, vector<1x1x15x10xf32>,
    return
  }
  func.func @transform_0(%arg0: i32) -> (i32, i32, i32, i32, i32) {
    %c0_i32 = arith.constant 0 : i32
    %c0_i32_0 = arith.constant 0 : i32
    %c0_i32_1 = arith.constant 0 : i32
    %c0_i32_2 = arith.constant 0 : i32
    %c0_i32_3 = arith.constant 0 : i32
    return %arg0, %c0_i32, %c0_i32_0, %c0_i32_1, %c0_i32_2 : i32, i32, i32, i32, i32
  }
  func.func @transform_1(%arg0: i32) -> (i32, i32) {
    %c0_i32 = arith.constant 0 : i32
    %c0_i32_0 = arith.constant 0 : i32
    %c0_i32_1 = arith.constant 0 : i32
    return %c0_i32, %c0_i32_0 : i32, i32
  }
  func.func @transform_2(%arg0: i32) -> i32 {
    %c0_i32 = arith.constant 0 : i32
    %c0_i32_0 = arith.constant 0 : i32
    return %c0_i32 : i32
  }
  func.func @transform_3(%arg0: i32) -> (i32, i32, i32, i32) {
    %c0_i32 = arith.constant 0 : i32
    %c0_i32_0 = arith.constant 0 : i32
    %c0_i32_1 = arith.constant 0 : i32
    %c0_i32_2 = arith.constant 0 : i32
    return %arg0, %c0_i32, %c0_i32_0, %c0_i32_1 : i32, i32, i32, i32
  }
}

</mosaic_0001>

<llo_original>
// kernel: mul.15
$region0: #{mul.15}
  %s0 = inlined_call_operand.vmem [shape: f32[2,4,2,2], index: 0, kind: input, shape index: {}]
  %s1 = inlined_call_operand.vmem [shape: f32[2,16], index: 1, kind: output, shape index: {}]
  $region1: #{mul.15} parent=0
    #allocation0 [shape = 'u8[4096]{0}', space=vmem, size = 0x1000, scoped, tag = 'scoped mem for output reshape']
    #allocation1 [shape = 'u8[32768]{0}', space=vmem, size = 0x8000, scoped, tag = 'scoped mem for input reshape']
    %s3 = sshllo.u32 0, 2
    %s4 = smul.addr 2, 7
    %s5 = scalar_lea.vmem %s0, %s4
    %v6 = vld [vmem:[%s5] sm:%s3]
    %s7 = scalar_lea.vmem [#allocation1], 56
    %8 = vst [vmem:[%s7] sm:%s3] %v6
    %s9 = smul.addr 2, 6
    %s10 = scalar_lea.vmem %s0, %s9
    %v11 = vld [vmem:[%s10] sm:%s3]
    %s12 = scalar_lea.vmem [#allocation1], 48
    %13 = vst [vmem:[%s12] sm:%s3] %v11
    %s14 = smul.addr 2, 5
    %s15 = scalar_lea.vmem %s0, %s14
    %v16 = vld [vmem:[%s15] sm:%s3]
    %s17 = scalar_lea.vmem [#allocation1], 40
    %18 = vst [vmem:[%s17] sm:%s3] %v16
    %s19 = smul.addr 2, 4
    %s20 = scalar_lea.vmem %s0, %s19
    %v21 = vld [vmem:[%s20] sm:%s3]
    %s22 = scalar_lea.vmem [#allocation1], 32
    %23 = vst [vmem:[%s22] sm:%s3] %v21
    %s24 = smul.addr 2, 3
    %s25 = scalar_lea.vmem %s0, %s24
    %v26 = vld [vmem:[%s25] sm:%s3]
    %s27 = scalar_lea.vmem [#allocation1], 24
    %28 = vst [vmem:[%s27] sm:%s3] %v26
    %s29 = smul.addr 2, 2
    %s30 = scalar_lea.vmem %s0, %s29
    %v31 = vld [vmem:[%s30] sm:%s3]
    %s32 = scalar_lea.vmem [#allocation1], 16
    %33 = vst [vmem:[%s32] sm:%s3] %v31
    %s34 = scalar_lea.vmem %s0, 2
    %v35 = vld [vmem:[%s34] sm:%s3]
    %s36 = scalar_lea.vmem [#allocation1], 8
    %37 = vst [vmem:[%s36] sm:%s3] %v35
    %v38 = vld [vmem:[%s0] sm:%s3]
    %39 = vst [vmem:[#allocation1] sm:%s3] %v38
    %v40 = vld [vmem:[#allocation1] sm:$0x1]
    %s41 = scalar_lea.vmem [#allocation1], 31
    %v42 = vld [vmem:[%s41] sm:$0x2]
    %vm43 = vcmask 1041409
    %v44 = vsel %vm43, %v42, %v40
    %vm45 = vcmask 15360
    %46 = vst.msk [vmem:[#allocation0] sm:$0x3] %vm45, %v44
    %s47 = scalar_lea.vmem [#allocation1], 25
    %v48 = vld [vmem:[%s47] sm:$0x1]
    %s49 = scalar_lea.vmem [#allocation1], 56
    %v50 = vld [vmem:[%s49] sm:$0x2]
    %vm51 = vcmask 1041409
    %v52 = vsel %vm51, %v50, %v48
    %53 = vrot.lane.b32.xlu0 %v52, 14
    %v54 = vpop.permute.xlu0 %53
    %vm55 = vcmask 130160
    %56 = vst.msk [vmem:[#allocation0] sm:$0x3] %vm55, %v54
    %s57 = scalar_lea.vmem [#allocation1], 24
    %v58 = vld [vmem:[%s57] sm:$0x1]
    %s59 = scalar_lea.vmem [#allocation1], 55
    %v60 = vld [vmem:[%s59] sm:$0x2]
    %vm61 = vcmask 1041409
    %v62 = vsel %vm61, %v60, %v58
    %63 = vrot.lane.b32.xlu0 %v62, 12
    %v64 = vpop.permute.xlu0 %63
    %vm65 = vcmask 113760
    %66 = vst.msk [vmem:[#allocation0] sm:$0x3] %vm65, %v64
    %s67 = scalar_lea.vmem [#allocation1], 17
    %v68 = vld [vmem:[%s67] sm:$0x1]
    %s69 = scalar_lea.vmem [#allocation1], 48
    %v70 = vld [vmem:[%s69] sm:$0x2]
    %vm71 = vcmask 1041409
    %v72 = vsel %vm71, %v70, %v68
    %73 = vrot.lane.b32.xlu0 %v72, 10
    %v74 = vpop.permute.xlu0 %73
    %vm75 = vcmask 97360
    %76 = vst.msk [vmem:[#allocation0] sm:$0x3] %vm75, %v74
    %s77 = scalar_lea.vmem [#allocation1], 16
    %v78 = vld [vmem:[%s77] sm:$0x1]
    %s79 = scalar_lea.vmem [#allocation1], 47
    %v80 = vld [vmem:[%s79] sm:$0x2]
    %vm81 = vcmask 1041409
    %v82 = vsel %vm81, %v80, %v78
    %83 = vrot.lane.b32.xlu0 %v82, 8
    %v84 = vpop.permute.xlu0 %83
    %vm85 = vcmask 80960
    %86 = vst.msk [vmem:[#allocation0] sm:$0x3] %vm85, %v84
    %s87 = scalar_lea.vmem [#allocation1], 9
    %v88 = vld [vmem:[%s87] sm:$0x1]
    %s89 = scalar_lea.vmem [#allocation1], 40
    %v90 = vld [vmem:[%s89] sm:$0x2]
    %vm91 = vcmask 1041409
    %v92 = vsel %vm91, %v90, %v88
    %93 = vrot.lane.b32.xlu0 %v92, 6
    %v94 = vpop.permute.xlu0 %93
    %vm95 = vcmask 64560
    %96 = vst.msk [vmem:[#allocation0] sm:$0x3] %vm95, %v94
    %s97 = scalar_lea.vmem [#allocation1], 8
    %v98 = vld [vmem:[%s97] sm:$0x1]
    %s99 = scalar_lea.vmem [#allocation1], 39
    %v100 = vld [vmem:[%s99] sm:$0x2]
    %vm101 = vcmask 1041409
    %v102 = vsel %vm101, %v100, %v98
    %103 = vrot.lane.b32.xlu0 %v102, 4
    %v104 = vpop.permute.xlu0 %103
    %vm105 = vcmask 48160
    %106 = vst.msk [vmem:[#allocation0] sm:$0x3] %vm105, %v104
    %s107 = scalar_lea.vmem [#allocation1], 1
    %v108 = vld [vmem:[%s107] sm:$0x1]
    %s109 = scalar_lea.vmem [#allocation1], 32
    %v110 = vld [vmem:[%s109] sm:$0x2]
    %vm111 = vcmask 1041409
    %v112 = vsel %vm111, %v110, %v108
    %113 = vrot.lane.b32.xlu0 %v112, 2
    %v114 = vpop.permute.xlu0 %113
    %vm115 = vcmask 31760
    %116 = vst.msk [vmem:[#allocation0] sm:$0x3] %vm115, %v114
    %s118 = sshllo.u32 0, 2
    %v120 = vld [vmem:[#allocation0] sm:%s118]
    %s121 = sshllo.u32 0, 2
    %122 = vst [vmem:[%s1] sm:%s121] %v120

// kernel: model_forward.1
$region0: #{model_forward.1}
  #allocation0 [shape = 'u32[]', space=smem, size = 0x4, offset = 0x4, fixed_abs, tag = 'smem constant byte address 0x4 - core index']
  #allocation1 [shape = 'u32[144,128]{1,0:T(1,128)}', space=vmem, size = 0x12000, scoped, tag = 'internal scratch']
  %s0 = inlined_call_operand.vmem [shape: f32[2,4,2,16,10], index: 0, kind: input, shape index: {}]
  %s1 = inlined_call_operand.vmem [shape: f32[2,16], index: 1, kind: input, shape index: {}]
  %s2 = inlined_call_operand.vmem [shape: f32[2], index: 2, kind: input, shape index: {}]
  %s3 = inlined_call_operand.vmem [shape: f32[2,2,15,10], index: 3, kind: output, shape index: {}]
  %s4 = sld [smem:[#allocation0]]
  $region53: #{model_forward.1} parent=0
    _
  %s6 = ssub.s32 1, %s4
  %s7 = scalar_select 0, %s6, %s4
  $region1: #{model_forward.1} parent=0
    #allocation2 [shape = 'u8[1024]{0}', space=smem, size = 0x400, scoped, tag = 'input window, operand 1, single buffered']
    #allocation3 [shape = 's32[2]{0}', space=sflag, size = 0x8, scoped, tag = 'scoped memory for model_forward.1']
    #allocation4 [shape = 'u8[512]{0}', space=smem, size = 0x200, scoped, tag = 'input window, operand 2, single buffered']
    #allocation5 [shape = 's32[1]{0}', space=sflag, size = 0x4, scoped, tag = 'scoped memory for model_forward.1']
    %8 = vsyncpa [#allocation3], 0
    %9 = vsyncpa [#allocation5], 0
    loop: start=0, step=1, limit=4
    $region2: #{model_forward.1} parent=1 // loop_pre_header
      _
    $region3: #{model_forward.1} parent=1 // loop_header
      %s11 = sphi 0, %s15
      %p12 = scmp.ge.s32.totalorder %s11, 4
      %s21 = sphi 0, %s23
      %s24 = sphi 0, %s21
      %s25 = sphi 0, %s24
      %s41 = sphi 0, %s25
      %s45 = sphi 0, %s45
      %s47 = sphi 0, %s45
      %s48 = sphi 0, %s47
      %s62 = sphi 0, %s48
      %s66 = sphi 0, %s66
      %s68 = sphi 0, %s66
      %s69 = sphi 0, %s68
      %s83 = sphi 0, %s69
      %s89 = sphi 0, %s91
      %s92 = sphi 0, %s89
      %s93 = sphi 0, %s92
      %s109 = sphi 0, %s93
    $region4: #{model_forward.1} parent=1 // loop_header_branch
      %14 = sbr.rel (%p12) target = $region8
    $region5: #{model_forward.1} parent=1 // loop_body
      %s16 = ssub.s32 %s11, 1
      %s17 = ssub.s32 %s11, 2
      %s18 = sadd.s32 %s11, 1
      %s19 = ssub.s32 %s11, %s18
      %p20 = scmp.eq.s32.totalorder %s19, 0
      %s22 = sadd.s32 %s21, 1
      %s23 = scalar_select %p20, %s21, %s22
      %p26 = pneg %p20
      %p27 = scmp.eq.s32.totalorder %s11, 1
      %p28 = por %p26, %p27
      %p29 = scmp.ne.s32.totalorder %s21, %s24
      %p30 = scmp.eq.s32.totalorder %s11, 0
      %p31 = por %p29, %p30
      %p32 = scmp.ne.s32.totalorder %s21, %s24
      %p33 = scmp.eq.s32.totalorder %s16, 1
      %p34 = por %p32, %p33
      %p35 = scmp.ne.s32.totalorder %s24, %s25
      %p36 = scmp.eq.s32.totalorder %s16, 0
      %p37 = por %p35, %p36
      %p38 = scmp.ne.s32.totalorder %s24, %s25
      %p39 = scmp.eq.s32.totalorder %s17, 1
      %p40 = por %p38, %p39
      %p42 = scmp.ne.s32.totalorder %s25, %s41
      %p43 = scmp.eq.s32.totalorder %s17, 0
      %p44 = por %p42, %p43
      %s46 = sadd.s32 %s45, 1
      %p49 = scmp.eq.s32.totalorder %s11, 1
      %p50 = scmp.ne.s32.totalorder %s45, %s47
      %p51 = scmp.eq.s32.totalorder %s11, 0
      %p52 = por %p50, %p51
      %p53 = scmp.ne.s32.totalorder %s45, %s47
      %p54 = scmp.eq.s32.totalorder %s16, 1
      %p55 = por %p53, %p54
      %p56 = scmp.ne.s32.totalorder %s47, %s48
      %p57 = scmp.eq.s32.totalorder %s16, 0
      %p58 = por %p56, %p57
      %p59 = scmp.ne.s32.totalorder %s47, %s48
      %p60 = scmp.eq.s32.totalorder %s17, 1
      %p61 = por %p59, %p60
      %p63 = scmp.ne.s32.totalorder %s48, %s62
      %p64 = scmp.eq.s32.totalorder %s17, 0
      %p65 = por %p63, %p64
      %s67 = sadd.s32 %s66, 1
      %p70 = scmp.eq.s32.totalorder %s11, 1
      %p71 = scmp.ne.s32.totalorder %s66, %s68
      %p72 = scmp.eq.s32.totalorder %s11, 0
      %p73 = por %p71, %p72
      %p74 = scmp.ne.s32.totalorder %s66, %s68
      %p75 = scmp.eq.s32.totalorder %s16, 1
      %p76 = por %p74, %p75
      %p77 = scmp.ne.s32.totalorder %s68, %s69
      %p78 = scmp.eq.s32.totalorder %s16, 0
      %p79 = por %p77, %p78
      %p80 = scmp.ne.s32.totalorder %s68, %s69
      %p81 = scmp.eq.s32.totalorder %s17, 1
      %p82 = por %p80, %p81
      %p84 = scmp.ne.s32.totalorder %s69, %s83
      %p85 = scmp.eq.s32.totalorder %s17, 0
      %p86 = por %p84, %p85
      %s87 = ssub.s32 %s11, %s18
      %p88 = scmp.eq.s32.totalorder %s87, 0
      %s90 = sadd.s32 %s89, 1
      %s91 = scalar_select %p88, %s89, %s90
      %p94 = pneg %p88
      %p95 = scmp.eq.s32.totalorder %s11, 1
      %p96 = por %p94, %p95
      %p97 = scmp.ne.s32.totalorder %s89, %s92
      %p98 = scmp.eq.s32.totalorder %s11, 0
      %p99 = por %p97, %p98
      %p100 = scmp.ne.s32.totalorder %s89, %s92
      %p101 = scmp.eq.s32.totalorder %s16, 1
      %p102 = por %p100, %p101
      %p103 = scmp.ne.s32.totalorder %s92, %s93
      %p104 = scmp.eq.s32.totalorder %s16, 0
      %p105 = por %p103, %p104
      %p106 = scmp.ne.s32.totalorder %s92, %s93
      %p107 = scmp.eq.s32.totalorder %s17, 1
      %p108 = por %p106, %p107
      %p110 = scmp.ne.s32.totalorder %s93, %s109
      %p111 = scmp.eq.s32.totalorder %s17, 0
      %p112 = por %p110, %p111
      %p113 = scmp.le.s32.totalorder 1, %s11
      %p114 = scmp.lt.s32.totalorder %s11, 3
      %p115 = pnand %p113, %p114
      %p116 = pneg %p115
      // Predicated region
      $region9: #{model_forward.1} parent=5 // pred_check
        _
      $region10: #{model_forward.1} parent=5 // pred_check_branch
        %118 = sbr.rel (%p115) target = $region12
      $region11: #{model_forward.1} parent=5 // pred_region
        %s119 = ssub.s32 %s11, 1
        // Predicated region
        $region13: #{model_forward.1} parent=11 // pred_check
          %p120 = pneg %p58
        $region14: #{model_forward.1} parent=11 // pred_check_branch
          %122 = sbr.rel (%p120) target = $region16
        $region15: #{model_forward.1} parent=11 // pred_region
          %s124 = ssub.s32 32, 32
          %125 = vsyncadd [#allocation3], %s124
          %s127 = sshll.u32 %s1, 4
          %s128 = int_to_ptr.vmem [resolvable:$true] %s127
          %130 = dma.vmem_to_smem %s128, 32, [#allocation2], [#allocation3]
        $region16: #{model_forward.1} parent=11 // pred_fallthru
          _
        // Predicated region
        $region17: #{model_forward.1} parent=11 // pred_check
          %p131 = pneg %p79
        $region18: #{model_forward.1} parent=11 // pred_check_branch
          %133 = sbr.rel (%p131) target = $region20
        $region19: #{model_forward.1} parent=11 // pred_region
          %s135 = ssub.s32 16, 16
          %136 = vsyncadd [#allocation5], %s135
          %s138 = sshll.u32 %s2, 4
          %s139 = int_to_ptr.vmem [resolvable:$true] %s138
          %141 = dma.vmem_to_smem %s139, 16, [#allocation4], [#allocation5]
        $region20: #{model_forward.1} parent=11 // pred_fallthru
          _
      $region12: #{model_forward.1} parent=5 // pred_fallthru
        _
      %p142 = scmp.lt.s32.totalorder %s11, 2
      // Predicated region
      $region21: #{model_forward.1} parent=5 // pred_check
        %p143 = pneg %p142
      $region22: #{model_forward.1} parent=5 // pred_check_branch
        %145 = sbr.rel (%p143) target = $region24
      $region23: #{model_forward.1} parent=5 // pred_region
        // Predicated region
        $region25: #{model_forward.1} parent=23 // pred_check
          %p146 = pneg %p31
        $region26: #{model_forward.1} parent=23 // pred_check_branch
          %148 = sbr.rel (%p146) target = $region28
        $region27: #{model_forward.1} parent=23 // pred_region
          %p149 = scmp.lt.s32.totalorder %s11, 1
          %s150 = scalar_select %p149, %s11, 1
          %s151 = smul.addr %s150, 16
          %s152 = smul.addr %s151, 8
          %s153 = scalar_lea.vmem %s0, %s152
        $region28: #{model_forward.1} parent=23 // pred_fallthru
          _
      $region24: #{model_forward.1} parent=5 // pred_fallthru
        _
      %p154 = scmp.le.s32.totalorder 1, %s11
      %p155 = scmp.lt.s32.totalorder %s11, 3
      %p156 = pnand %p154, %p155
      %p157 = pneg %p156
      // Predicated region
      $region29: #{model_forward.1} parent=5 // pred_check
        _
      $region30: #{model_forward.1} parent=5 // pred_check_branch
        %159 = sbr.rel (%p156) target = $region32
      $region31: #{model_forward.1} parent=5 // pred_region
        %s160 = ssub.s32 %s11, 1
        // Predicated region
        $region33: #{model_forward.1} parent=31 // pred_check
          %p161 = pneg %p58
        $region34: #{model_forward.1} parent=31 // pred_check_branch
          %163 = sbr.rel (%p161) target = $region36
        $region35: #{model_forward.1} parent=31 // pred_region
          %164 = dma.done [#allocation3], 32
        $region36: #{model_forward.1} parent=31 // pred_fallthru
          _
        // Predicated region
        $region37: #{model_forward.1} parent=31 // pred_check
          %p165 = pneg %p79
        $region38: #{model_forward.1} parent=31 // pred_check_branch
          %167 = sbr.rel (%p165) target = $region40
        $region39: #{model_forward.1} parent=31 // pred_region
          %168 = dma.done [#allocation5], 16
        $region40: #{model_forward.1} parent=31 // pred_fallthru
          _
        %169 = sfence
        %p170 = scmp.lt.s32.totalorder %s16, 1
        %s171 = scalar_select %p170, %s16, 1
        %s172 = smul.addr %s171, 16
        %s173 = smul.addr %s172, 8
        %s174 = scalar_lea.vmem %s0, %s173
        %p175 = pneg %p37
        %p176 = pneg %p34
        %p177 = pneg %p58
        %p178 = pneg %p55
        %p179 = pneg %p79
        %p180 = pneg %p76
        %p181 = pneg %p105
        %p182 = pneg %p102
        %p183 = scmp.lt.s32.totalorder %s16, 1
        %s184 = scalar_select %p183, %s16, 1
        %s185 = smul.addr %s184, 4
        %s186 = smul.addr %s185, 8
        %s187 = scalar_lea.vmem %s3, %s186
        %p188 = scmp.lt.s32.totalorder %s16, 1
        %s189 = scalar_select %p188, %s16, 1
        %s190 = smul.addr %s189, 16
        %s191 = smul.addr %s190, 8
        %s192 = scalar_lea.vmem %s0, %s191
        %p193 = scmp.lt.s32.totalorder %s16, 1
        %s194 = scalar_select %p193, %s16, 1
        %s195 = smul.addr %s194, 4
        %s196 = smul.addr %s195, 8
        %s197 = scalar_lea.vmem %s3, %s196
        %s198 = sld [smem:[#allocation4]]
        %v199 = vstv %s198
        %v200 = vadd.f32 %v199, 0.0
        %s201 = sld [smem:[#allocation4 + $0x1]]
        %v202 = vstv %s201
        %v203 = vadd.f32 %v202, 0.0
        %v204 = vld [vmem:[%s192] sm:$0xff]
        %v205 = vld [vmem:[%s192 + $0x8] sm:$0x7f]
        %s206 = sld [smem:[#allocation2]]
        %v207 = vstv %s206
        %v208 = vmul.f32 %v207, %v204
        %v209 = vmul.f32 %v207, %v205
        %v210 = vadd.f32 %v200, %v208
        %v211 = vadd.f32 %v200, %v209
        %s212 = sld [smem:[#allocation2 + $0x80]]
        %v213 = vstv %s212
        %v214 = vmul.f32 %v213, %v204
        %v215 = vmul.f32 %v213, %v205
        %v216 = vadd.f32 %v203, %v214
        %v217 = vadd.f32 %v203, %v215
        %s218 = scalar_lea.vmem %s192, 16
        %v219 = vld [vmem:[%s218] sm:$0xff]
        %v220 = vld [vmem:[%s218 + $0x8] sm:$0x7f]
        %s221 = sld [smem:[#allocation2 + $0x1]]
        %v222 = vstv %s221
        %v223 = vmul.f32 %v222, %v219
        %v224 = vmul.f32 %v222, %v220
        %v225 = vadd.f32 %v210, %v223
        %v226 = vadd.f32 %v211, %v224
        %s227 = sld [smem:[#allocation2 + $0x81]]
        %v228 = vstv %s227
        %v229 = vmul.f32 %v228, %v219
        %v230 = vmul.f32 %v228, %v220
        %v231 = vadd.f32 %v216, %v229
        %v232 = vadd.f32 %v217, %v230
        %v233 = vld [vmem:[%s192 + $0x1] sm:$0xff]
        %v234 = vld [vmem:[%s192 + $0x9] sm:$0x7f]
        %s235 = sld [smem:[#allocation2 + $0x2]]
        %v236 = vstv %s235
        %v237 = vmul.f32 %v236, %v233
        %v238 = vmul.f32 %v236, %v234
        %v239 = vadd.f32 %v225, %v237
        %v240 = vadd.f32 %v226, %v238
        %s241 = sld [smem:[#allocation2 + $0x82]]
        %v242 = vstv %s241
        %v243 = vmul.f32 %v242, %v233
        %v244 = vmul.f32 %v242, %v234
        %v245 = vadd.f32 %v231, %v243
        %v246 = vadd.f32 %v232, %v244
        %v247 = vld [vmem:[%s218 + $0x1] sm:$0xff]
        %v248 = vld [vmem:[%s218 + $0x9] sm:$0x7f]
        %s249 = sld [smem:[#allocation2 + $0x3]]
        %v250 = vstv %s249
        %v251 = vmul.f32 %v250, %v247
        %v252 = vmul.f32 %v250, %v248
        %v253 = vadd.f32 %v239, %v251
        %v254 = vadd.f32 %v240, %v252
        %s255 = sld [smem:[#allocation2 + $0x83]]
        %v256 = vstv %s255
        %v257 = vmul.f32 %v256, %v247
        %v258 = vmul.f32 %v256, %v248
        %v259 = vadd.f32 %v245, %v257
        %v260 = vadd.f32 %v246, %v258
        %s261 = scalar_lea.vmem %s192, 32
        %v262 = vld [vmem:[%s261] sm:$0xff]
        %v263 = vld [vmem:[%s261 + $0x8] sm:$0x7f]
        %s264 = sld [smem:[#allocation2 + $0x4]]
        %v265 = vstv %s264
        %v266 = vmul.f32 %v265, %v262
        %v267 = vmul.f32 %v265, %v263
        %v268 = vadd.f32 %v253, %v266
        %v269 = vadd.f32 %v254, %v267
        %s270 = sld [smem:[#allocation2 + $0x84]]
        %v271 = vstv %s270
        %v272 = vmul.f32 %v271, %v262
        %v273 = vmul.f32 %v271, %v263
        %v274 = vadd.f32 %v259, %v272
        %v275 = vadd.f32 %v260, %v273
        %s276 = scalar_lea.vmem %s192, 48
        %v277 = vld [vmem:[%s276] sm:$0xff]
        %v278 = vld [vmem:[%s276 + $0x8] sm:$0x7f]
        %s279 = sld [smem:[#allocation2 + $0x5]]
        %v280 = vstv %s279
        %v281 = vmul.f32 %v280, %v277
        %v282 = vmul.f32 %v280, %v278
        %v283 = vadd.f32 %v268, %v281
        %v284 = vadd.f32 %v269, %v282
        %s285 = sld [smem:[#allocation2 + $0x85]]
        %v286 = vstv %s285
        %v287 = vmul.f32 %v286, %v277
        %v288 = vmul.f32 %v286, %v278
        %v289 = vadd.f32 %v274, %v287
        %v290 = vadd.f32 %v275, %v288
        %v291 = vld [vmem:[%s261 + $0x1] sm:$0xff]
        %v292 = vld [vmem:[%s261 + $0x9] sm:$0x7f]
        %s293 = sld [smem:[#allocation2 + $0x6]]
        %v294 = vstv %s293
        %v295 = vmul.f32 %v294, %v291
        %v296 = vmul.f32 %v294, %v292
        %v297 = vadd.f32 %v283, %v295
        %v298 = vadd.f32 %v284, %v296
        %s299 = sld [smem:[#allocation2 + $0x86]]
        %v300 = vstv %s299
        %v301 = vmul.f32 %v300, %v291
        %v302 = vmul.f32 %v300, %v292
        %v303 = vadd.f32 %v289, %v301
        %v304 = vadd.f32 %v290, %v302
        %v305 = vld [vmem:[%s276 + $0x1] sm:$0xff]
        %v306 = vld [vmem:[%s276 + $0x9] sm:$0x7f]
        %s307 = sld [smem:[#allocation2 + $0x7]]
        %v308 = vstv %s307
        %v309 = vmul.f32 %v308, %v305
        %v310 = vmul.f32 %v308, %v306
        %v311 = vadd.f32 %v297, %v309
        %v312 = vadd.f32 %v298, %v310
        %s313 = sld [smem:[#allocation2 + $0x87]]
        %v314 = vstv %s313
        %v315 = vmul.f32 %v314, %v305
        %v316 = vmul.f32 %v314, %v306
        %v317 = vadd.f32 %v303, %v315
        %v318 = vadd.f32 %v304, %v316
        %s319 = scalar_lea.vmem %s192, 64
        %v320 = vld [vmem:[%s319] sm:$0xff]
        %v321 = vld [vmem:[%s319 + $0x8] sm:$0x7f]
        %s322 = sld [smem:[#allocation2 + $0x8]]
        %v323 = vstv %s322
        %v324 = vmul.f32 %v323, %v320
        %v325 = vmul.f32 %v323, %v321
        %v326 = vadd.f32 %v311, %v324
        %v327 = vadd.f32 %v312, %v325
        %s328 = sld [smem:[#allocation2 + $0x88]]
        %v329 = vstv %s328
        %v330 = vmul.f32 %v329, %v320
        %v331 = vmul.f32 %v329, %v321
        %v332 = vadd.f32 %v317, %v330
        %v333 = vadd.f32 %v318, %v331
        %s334 = scalar_lea.vmem %s192, 80
        %v335 = vld [vmem:[%s334] sm:$0xff]
        %v336 = vld [vmem:[%s334 + $0x8] sm:$0x7f]
        %s337 = sld [smem:[#allocation2 + $0x9]]
        %v338 = vstv %s337
        %v339 = vmul.f32 %v338, %v335
        %v340 = vmul.f32 %v338, %v336
        %v341 = vadd.f32 %v326, %v339
        %v342 = vadd.f32 %v327, %v340
        %s343 = sld [smem:[#allocation2 + $0x89]]
        %v344 = vstv %s343
        %v345 = vmul.f32 %v344, %v335
        %v346 = vmul.f32 %v344, %v336
        %v347 = vadd.f32 %v332, %v345
        %v348 = vadd.f32 %v333, %v346
        %v349 = vld [vmem:[%s319 + $0x1] sm:$0xff]
        %v350 = vld [vmem:[%s319 + $0x9] sm:$0x7f]
        %s351 = sld [smem:[#allocation2 + $0xa]]
        %v352 = vstv %s351
        %v353 = vmul.f32 %v352, %v349
        %v354 = vmul.f32 %v352, %v350
        %v355 = vadd.f32 %v341, %v353
        %v356 = vadd.f32 %v342, %v354
        %s357 = sld [smem:[#allocation2 + $0x8a]]
        %v358 = vstv %s357
        %v359 = vmul.f32 %v358, %v349
        %v360 = vmul.f32 %v358, %v350
        %v361 = vadd.f32 %v347, %v359
        %v362 = vadd.f32 %v348, %v360
        %v363 = vld [vmem:[%s334 + $0x1] sm:$0xff]
        %v364 = vld [vmem:[%s334 + $0x9] sm:$0x7f]
        %s365 = sld [smem:[#allocation2 + $0xb]]
        %v366 = vstv %s365
        %v367 = vmul.f32 %v366, %v363
        %v368 = vmul.f32 %v366, %v364
        %v369 = vadd.f32 %v355, %v367
        %v370 = vadd.f32 %v356, %v368
        %s371 = sld [smem:[#allocation2 + $0x8b]]
        %v372 = vstv %s371
        %v373 = vmul.f32 %v372, %v363
        %v374 = vmul.f32 %v372, %v364
        %v375 = vadd.f32 %v361, %v373
        %v376 = vadd.f32 %v362, %v374
        %s377 = scalar_lea.vmem %s192, 96
        %v378 = vld [vmem:[%s377] sm:$0xff]
        %v379 = vld [vmem:[%s377 + $0x8] sm:$0x7f]
        %s380 = sld [smem:[#allocation2 + $0xc]]
        %v381 = vstv %s380
        %v382 = vmul.f32 %v381, %v378
        %v383 = vmul.f32 %v381, %v379
        %v384 = vadd.f32 %v369, %v382
        %v385 = vadd.f32 %v370, %v383
        %s386 = sld [smem:[#allocation2 + $0x8c]]
        %v387 = vstv %s386
        %v388 = vmul.f32 %v387, %v378
        %v389 = vmul.f32 %v387, %v379
        %v390 = vadd.f32 %v375, %v388
        %v391 = vadd.f32 %v376, %v389
        %s392 = scalar_lea.vmem %s192, 112
        %v393 = vld [vmem:[%s392] sm:$0xff]
        %v394 = vld [vmem:[%s392 + $0x8] sm:$0x7f]
        %s395 = sld [smem:[#allocation2 + $0xd]]
        %v396 = vstv %s395
        %v397 = vmul.f32 %v396, %v393
        %v398 = vmul.f32 %v396, %v394
        %v399 = vadd.f32 %v384, %v397
        %v400 = vadd.f32 %v385, %v398
        %s401 = sld [smem:[#allocation2 + $0x8d]]
        %v402 = vstv %s401
        %v403 = vmul.f32 %v402, %v393
        %v404 = vmul.f32 %v402, %v394
        %v405 = vadd.f32 %v390, %v403
        %v406 = vadd.f32 %v391, %v404
        %v407 = vld [vmem:[%s377 + $0x1] sm:$0xff]
        %v408 = vld [vmem:[%s377 + $0x9] sm:$0x7f]
        %s409 = sld [smem:[#allocation2 + $0xe]]
        %v410 = vstv %s409
        %v411 = vmul.f32 %v410, %v407
        %v412 = vmul.f32 %v410, %v408
        %v413 = vadd.f32 %v399, %v411
        %v414 = vadd.f32 %v400, %v412
        %s415 = sld [smem:[#allocation2 + $0x8e]]
        %v416 = vstv %s415
        %v417 = vmul.f32 %v416, %v407
        %v418 = vmul.f32 %v416, %v408
        %v419 = vadd.f32 %v405, %v417
        %v420 = vadd.f32 %v406, %v418
        %v421 = vld [vmem:[%s392 + $0x1] sm:$0xff]
        %v422 = vld [vmem:[%s392 + $0x9] sm:$0x7f]
        %s423 = sld [smem:[#allocation2 + $0xf]]
        %v424 = vstv %s423
        %v425 = vmul.f32 %v424, %v421
        %v426 = vmul.f32 %v424, %v422
        %v427 = vadd.f32 %v413, %v425
        %v428 = vadd.f32 %v414, %v426
        %s429 = sld [smem:[#allocation2 + $0x8f]]
        %v430 = vstv %s429
        %v431 = vmul.f32 %v430, %v421
        %v432 = vmul.f32 %v430, %v422
        %v433 = vadd.f32 %v419, %v431
        %v434 = vadd.f32 %v420, %v432
        %vm435 = vcmp.gt.f32.partialorder %v427, 0.0
        %vm436 = vcmp.gt.f32.partialorder %v428, 0.0
        %v437 = vmul.f32 %v427, 0.6904382
        %v438 = vmul.f32 %v428, 0.6904382
        %v439 = vsel %vm435, %v427, %v437
        %v440 = vsel %vm436, %v428, %v438
        %vm441 = vcmask 80896
        %442 = vst.msk [vmem:[%s197] sm:$0xff] %vm441, %v439
        %vm443 = vcmask 79872
        %444 = vst.msk [vmem:[%s197 + $0x8] sm:$0x7f] %vm443, %v440
        %vm445 = vcmp.gt.f32.partialorder %v433, 0.0
        %vm446 = vcmp.gt.f32.partialorder %v434, 0.0
        %v447 = vmul.f32 %v433, 0.6904382
        %v448 = vmul.f32 %v434, 0.6904382
        %v449 = vsel %vm445, %v433, %v447
        %v450 = vsel %vm446, %v434, %v448
        %s451 = scalar_lea.vmem %s197, 16
        %452 = vst.msk [vmem:[%s451] sm:$0xff] %vm441, %v449
        %453 = vst.msk [vmem:[%s451 + $0x8] sm:$0x7f] %vm443, %v450
        %p454 = scmp.lt.s32.totalorder %s16, 1
        %s455 = scalar_select %p454, %s16, 1
        %s456 = smul.addr %s455, 4
        %s457 = smul.addr %s456, 8
        %s458 = scalar_lea.vmem %s3, %s457
        // Predicated region
        $region41: #{model_forward.1} parent=31 // pred_check
          %p459 = pneg %p102
        $region42: #{model_forward.1} parent=31 // pred_check_branch
          %461 = sbr.rel (%p459) target = $region44
        $region43: #{model_forward.1} parent=31 // pred_region
          _
        $region44: #{model_forward.1} parent=31 // pred_fallthru
          _
      $region32: #{model_forward.1} parent=5 // pred_fallthru
        _
      %p462 = scmp.le.s32.totalorder 2, %s11
      // Predicated region
      $region45: #{model_forward.1} parent=5 // pred_check
        %p463 = pneg %p462
      $region46: #{model_forward.1} parent=5 // pred_check_branch
        %465 = sbr.rel (%p463) target = $region48
      $region47: #{model_forward.1} parent=5 // pred_region
        %s466 = ssub.s32 %s11, 2
        // Predicated region
        $region49: #{model_forward.1} parent=47 // pred_check
          %p467 = pneg %p108
        $region50: #{model_forward.1} parent=47 // pred_check_branch
          %469 = sbr.rel (%p467) target = $region52
        $region51: #{model_forward.1} parent=47 // pred_region
          %p470 = scmp.lt.s32.totalorder %s17, 1
          %s471 = scalar_select %p470, %s17, 1
          %s472 = smul.addr %s471, 4
          %s473 = smul.addr %s472, 8
          %s474 = scalar_lea.vmem %s3, %s473
        $region52: #{model_forward.1} parent=47 // pred_fallthru
          _
      $region48: #{model_forward.1} parent=5 // pred_fallthru
        _
    $region6: #{model_forward.1} parent=1 // loop_footer
      %s15 = sadd.s32 1, %s11
    $region7: #{model_forward.1} parent=1 // loop_footer_branch
      %10 = sbr.rel target = $region3
    $region8: #{model_forward.1} parent=1 // loop_exit
      _
    %475 = vsyncpa [#allocation3], 1
    %s476 = scalar_lea.sflag [#allocation3], 1
    %477 = vsyncpa %s476, 1
    %478 = vsyncpa [#allocation5], 1

</llo_original>
